<compile_context>
chip_gen: v7x
topology: tpu7x:2x2x1
jax: 0.10.0
libtpu: 0.0.40
codegen_flags: <defaults>
</compile_context>

<pallas_src>
import jax
import jax.numpy as jnp
from jax import lax
from jax.experimental import pallas as pl
from jax.experimental.pallas import tpu as pltpu


def _round_up(n, m):
    return (n + m - 1) // m * m


def _num_tensorcores_per_device():
    """Best-effort count of TensorCores behind one JAX device (megacore)."""
    try:
        dev = jax.devices()[0]
        if dev.platform != "tpu":
            return 1
        kind = str(getattr(dev, "device_kind", "")).lower()
        # v4 / v5p megacore and v7x expose two TensorCores per device.
        if any(tag in kind for tag in ("v4", "v5p", "v7")):
            return 2
    except Exception:
        pass
    return 1


def _max_tn_for_vmem(B, D, w_itemsize, budget_bytes=16 * 1024 * 1024):
    """Largest 128-multiple tile width whose double-buffered W tile +
    double-buffered f32 output tile + resident x block fit a conservative
    VMEM budget (safe under every generation's default scoped VMEM)."""
    per_col = 2 * D * w_itemsize + 2 * B * 4
    avail = budget_bytes - 2 * B * D * 4
    cols = max(128, avail // max(per_col, 1))
    return max(128, (cols // 128) * 128)


def _select_tn(OUTp, B, D, w_itemsize):
    ncores = _num_tensorcores_per_device()
    max_tn = _max_tn_for_vmem(B, D, w_itemsize)
    if ncores >= 2 and OUTp >= 256:
        # At least one 128-aligned tile per TensorCore so the parallel OUT
        # axis actually splits across cores.
        tn = _round_up(pl.cdiv(OUTp, ncores), 128)
    else:
        # Single-TC chip: one maximal tile -> fewest grid-step overheads.
        tn = OUTp
    return max(128, min(tn, max_tn, OUTp))


def _classifier_kernel(x_ref, wt_ref, o_ref):
    # x_ref : (B, D)  features (resident block, same every grid step)
    # wt_ref: (D, TN) pre-normalized, pre-transposed weight tile (bf16/f32)
    # o_ref : (B, TN) f32 cosine similarities (lane-dense output slab)
    x = x_ref[...].astype(jnp.float32)

    # F.normalize(x, eps=1e-12):  x / max(||x||, 1e-12)
    #   == x * rsqrt(max(sum(x*x), 1e-24))   (rsqrt runs on the EUP slot)
    sumsq = jnp.sum(x * x, axis=-1, keepdims=True)
    inv_norm = lax.rsqrt(jnp.maximum(sumsq, jnp.float32(1e-24)))
    x_n = (x * inv_norm).astype(wt_ref.dtype)

    # (B, D) @ (D, TN) on the MXU with f32 accumulation, no transpose needed.
    cos = jnp.dot(x_n, wt_ref[...], preferred_element_type=jnp.float32)
    o_ref[...] = cos.astype(o_ref.dtype)


def prepare_classifier_weight(weight, *, stream_dtype=jnp.bfloat16):
    """One-time weight prep (plain JAX, NOT per forward):
    F.normalize rows in f32 (eps=1e-12), transpose to (D, OUT) so OUT is the
    lane axis, zero-pad OUT to a multiple of 128, cast to streaming dtype."""
    w = weight.astype(jnp.float32)
    norm = jnp.sqrt(jnp.sum(w * w, axis=-1, keepdims=True))
    w_n = w / jnp.maximum(norm, jnp.float32(1e-12))
    w_t = jnp.transpose(w_n)  # (D, OUT)
    D, OUT = w_t.shape
    OUTp = _round_up(OUT, 128)
    if OUTp != OUT:
        w_t = jnp.pad(w_t, ((0, 0), (0, OUTp - OUT)))
    return w_t.astype(stream_dtype)  # (D, OUTp)


def classifier_forward(x, w_p, *, out_neurons=None, tn=None):
    """x: (B, 1, D); w_p: (D, OUTp) output of prepare_classifier_weight.
    out_neurons: true number of classes (<= OUTp); defaults to OUTp.
    Returns (B, 1, out_neurons) f32 cosine similarities."""
    assert x.ndim == 3 and x.shape[1] == 1
    B, _, D = x.shape
    D_w, OUTp = w_p.shape
    assert D == D_w and OUTp % 128 == 0
    OUT = OUTp if out_neurons is None else out_neurons
    assert 0 < OUT <= OUTp

    x2d = x.reshape(B, D)  # no per-call padding: full-extent block dims are legal

    w_bytes = int(jnp.dtype(w_p.dtype).itemsize)
    if tn is None:
        tn = _select_tn(OUTp, B, D, w_bytes)
    tn = max(128, min(_round_up(tn, 128), OUTp))
    n_tiles = pl.cdiv(OUTp, tn)  # ragged last tile allowed; OOB writes dropped

    out_p = pl.pallas_call(
        _classifier_kernel,
        out_shape=jax.ShapeDtypeStruct((B, OUTp), jnp.float32),
        grid_spec=pltpu.PrefetchScalarGridSpec(
            num_scalar_prefetch=0,
            grid=(n_tiles,),
            in_specs=[
                # x: same block every grid step -> stays resident in VMEM.
                pl.BlockSpec((B, D), lambda j: (0, 0)),
                # W_T: streamed tile-by-tile over OUT (double-buffered DMA).
                pl.BlockSpec((D, tn), lambda j: (0, j)),
            ],
            out_specs=pl.BlockSpec((B, tn), lambda j: (0, j)),
        ),
        compiler_params=pltpu.CompilerParams(
            dimension_semantics=("parallel",),
        ),
        cost_estimate=pl.CostEstimate(
            flops=2 * B * OUTp * D,
            transcendentals=B * n_tiles,
            bytes_accessed=B * D * 4 + D * OUTp * w_bytes + B * OUTp * 4,
        ),
    )(x2d, w_p)

    out = out_p if OUT == OUTp else out_p[:, :OUT]
    return out.reshape(B, 1, OUT)


def xavier_uniform(key, shape, dtype=jnp.float32):
    # nn.init.xavier_uniform_ for a (fan_out, fan_in) weight.
    fan_out, fan_in = shape
    bound = (6.0 / (fan_in + fan_out)) ** 0.5
    return jax.random.uniform(key, shape, dtype=dtype, minval=-bound, maxval=bound)


if __name__ == "__main__":
    # Small shapes consistent with the module (lin_blocks=0): the only
    # parameter is weight (out_neurons, input_size). Chosen so OUT needs
    # 128-padding and a forced-small tn exercises multi-tile + ragged blocks.
    B = 4      # batch
    D = 192    # input_size (lin_neurons-like)
    OUT = 600  # out_neurons (number of classes, small)

    key = jax.random.PRNGKey(0)
    k_x, k_w = jax.random.split(key)
    x = jax.random.normal(k_x, (B, 1, D), dtype=jnp.float32)
    weight = xavier_uniform(k_w, (OUT, D))

    # Pure-JAX reference with torch semantics (f32, eps=1e-12).
    def ref(x, w):
        x2 = x.reshape(B, D)
        xn = x2 / jnp.maximum(jnp.linalg.norm(x2, axis=-1, keepdims=True), 1e-12)
        wn = w / jnp.maximum(jnp.linalg.norm(w, axis=-1, keepdims=True), 1e-12)
        return (xn @ wn.T).reshape(B, 1, OUT)

    ref_out = ref(x, weight)

    # f32 weight streaming path, tn forced small -> multi-tile + ragged last
    # block (tight correctness check).
    w_p_f32 = prepare_classifier_weight(weight, stream_dtype=jnp.float32)
    out_f32 = jax.block_until_ready(
        classifier_forward(x, w_p_f32, out_neurons=OUT, tn=256))
    assert out_f32.shape == (B, 1, OUT)
    assert jnp.max(jnp.abs(out_f32 - ref_out)) < 1e-2

    # bf16 weight streaming path with auto-selected tn (default fast path).
    w_p_bf16 = prepare_classifier_weight(weight)  # bf16, padded once
    out_bf16 = jax.block_until_ready(
        classifier_forward(x, w_p_bf16, out_neurons=OUT))
    assert out_bf16.shape == (B, 1, OUT)
    assert jnp.max(jnp.abs(out_bf16 - ref_out)) < 3e-2
    assert jnp.all(out_bf16 >= -1.03) and jnp.all(out_bf16 <= 1.03)

    print("KERNEL_OK")
</pallas_src>

<mosaic_0001>
module attributes {stable_mosaic.version = 11 : i64} {
  func.func @_classifier_kernel(%arg0: i32, %arg1: memref<4x192xf32, #tpu.memory_space<vmem>>, %arg2: memref<192x256xf32, #tpu.memory_space<vmem>>, %arg3: memref<4x256xf32, #tpu.memory_space<vmem>>) attributes {dimension_semantics = [#tpu.dimension_semantics<parallel>], iteration_bounds = array<i64: 3>, scalar_prefetch = 0 : i64, scratch_operands = 0 : i64, tpu.core_type = #tpu.core_type<tc>, window_params = [{pipeline_mode = #tpu.pipeline_mode<synchronous>, transform_indices = @transform_0, window_bounds = array<i64: 4, 192>}, {transform_indices = @transform_1, window_bounds = array<i64: 192, 256>}, {transform_indices = @transform_2, window_bounds = array<i64: 4, 256>}]} {
    %c0 = arith.constant 0 : index
    %c0_0 = arith.constant 0 : index
    %0 = vector.load %arg1[%c0, %c0_0] : memref<4x192xf32, #tpu.memory_space<vmem>>, vector<4x192xf32>
    %1 = arith.mulf %0, %0 : vector<4x192xf32>
    %cst = arith.constant dense<0.000000e+00> : vector<4xf32>
    %2 = vector.multi_reduction <add>, %1, %cst [1] : vector<4x192xf32> to vector<4xf32>
    %3 = vector.shape_cast %2 : vector<4xf32> to vector<4x1xf32>
    %cst_1 = arith.constant 1.000000e-24 : f32
    %4 = vector.broadcast %cst_1 : f32 to vector<4x1xf32>
    %5 = arith.maximumf %3, %4 : vector<4x1xf32>
    %6 = math.rsqrt %5 : vector<4x1xf32>
    %7 = vector.broadcast %6 : vector<4x1xf32> to vector<4x192xf32>
    %8 = arith.mulf %0, %7 : vector<4x192xf32>
    %c0_2 = arith.constant 0 : index
    %c0_3 = arith.constant 0 : index
    %9 = vector.load %arg2[%c0_2, %c0_3] : memref<192x256xf32, #tpu.memory_space<vmem>>, vector<192x256xf32>
    %cst_4 = arith.constant dense<0.000000e+00> : vector<4x256xf32>
    %10 = tpu.matmul %8, %9, %cst_4 {dimension_numbers = #tpu.dot_dimension_numbers<[1], [0], [0], [1], [0, 0, 1, 1], [], []>} : vector<4x192xf32>, vector<192x256xf32>, vector<4x256xf32> -> vector<4x256xf32>
    %c0_5 = arith.constant 0 : index
    %c0_6 = arith.constant 0 : index
    %11 = vector.load %arg3[%c0_5, %c0_6] : memref<4x256xf32, #tpu.memory_space<vmem>>, vector<4x256xf32>
    tpu.vector_store %arg3[%c0_5, %c0_6], %10 {strides = array<i32>} : memref<4x256xf32, #tpu.memory_space<vmem>>, vector<4x256xf32>,
    return
  }
  func.func @transform_0(%arg0: i32) -> (i32, i32) {
    %c0_i32 = arith.constant 0 : i32
    %c0_i32_0 = arith.constant 0 : i32
    %c0_i32_1 = arith.constant 0 : i32
    return %c0_i32, %c0_i32_0 : i32, i32
  }
  func.func @transform_1(%arg0: i32) -> (i32, i32) {
    %c0_i32 = arith.constant 0 : i32
    %c0_i32_0 = arith.constant 0 : i32
    return %c0_i32, %arg0 : i32, i32
  }
  func.func @transform_2(%arg0: i32) -> (i32, i32) {
    %c0_i32 = arith.constant 0 : i32
    %c0_i32_0 = arith.constant 0 : i32
    return %c0_i32, %arg0 : i32, i32
  }
}

</mosaic_0001>

<llo_original>
// kernel: tpu_custom_call.1
$region0: #{tpu_custom_call.1}
  #allocation0 [shape = 'u32[]', space=smem, size = 0x4, offset = 0x4, fixed_abs, tag = 'smem constant byte address 0x4 - core index']
  #allocation1 [shape = 'u32[144,128]{1,0:T(1,128)}', space=vmem, size = 0x12000, scoped, tag = 'internal scratch']
  %s0 = inlined_call_operand.hbm [shape: f32[4,192], index: 0, kind: input, shape index: {}]
  %s1 = inlined_call_operand.hbm [shape: f32[192,640], index: 1, kind: input, shape index: {}]
  %s2 = inlined_call_operand.hbm [shape: f32[4,640], index: 2, kind: output, shape index: {}]
  %s3 = sld [smem:[#allocation0]]
  $region49: #{tpu_custom_call.1} parent=0
    _
  %s5 = ssub.s32 1, %s3
  %s6 = scalar_select 0, %s5, %s3
  $region1: #{tpu_custom_call.1} parent=0
    #allocation2 [shape = 'u8[4096]{0}', space=vmem, size = 0x1000, scoped, tag = 'input window, operand 0, single buffered']
    #allocation3 [shape = 's32[2]{0}', space=sflag, size = 0x8, scoped, tag = 'scoped memory for tpu_custom_call.1']
    #allocation4 [shape = 's32[2]{0}', space=sflag, size = 0x8, scoped, tag = 'scoped memory for tpu_custom_call.1']
    #allocation5 [shape = 'u8[393216]{0}', space=vmem, size = 0x60000, scoped, tag = 'input window, operand 1']
    #allocation6 [shape = 's32[2]{0}', space=sflag, size = 0x8, scoped, tag = 'scoped memory for tpu_custom_call.1']
    #allocation7 [shape = 'u8[8192]{0}', space=vmem, size = 0x2000, scoped, tag = 'output window, operand 0']
    %7 = vsyncpa [#allocation3], 0
    %8 = vsyncpa [#allocation6], 0
    %s9 = scalar_lea.sflag [#allocation6], 1
    %10 = vsyncpa %s9, 0
    %11 = vsyncpa [#allocation4], 0
    %s12 = scalar_lea.sflag [#allocation4], 1
    %13 = vsyncpa %s12, 0
    loop: start=0, step=1, limit=5
    $region2: #{tpu_custom_call.1} parent=1 // loop_pre_header
      _
    $region3: #{tpu_custom_call.1} parent=1 // loop_header
      %s15 = sphi 0, %s19
      %p16 = scmp.ge.s32.totalorder %s15, 5
      %s23 = sphi 0, %s23
      %s25 = sphi 0, %s23
      %s26 = sphi 0, %s25
      %s40 = sphi 0, %s26
      %s46 = sphi 0, %s48
      %s49 = sphi 0, %s46
      %s50 = sphi 0, %s49
      %s66 = sphi 0, %s50
      %s72 = sphi 0, %s74
      %s75 = sphi 0, %s72
      %s76 = sphi 0, %s75
      %s92 = sphi 0, %s76
    $region4: #{tpu_custom_call.1} parent=1 // loop_header_branch
      %18 = sbr.rel (%p16) target = $region8
    $region5: #{tpu_custom_call.1} parent=1 // loop_body
      %s20 = ssub.s32 %s15, 1
      %s21 = ssub.s32 %s15, 2
      %s22 = sadd.s32 %s15, 1
      %s24 = sadd.s32 %s23, 1
      %p27 = scmp.eq.s32.totalorder %s15, 2
      %p28 = scmp.ne.s32.totalorder %s23, %s25
      %p29 = scmp.eq.s32.totalorder %s15, 0
      %p30 = por %p28, %p29
      %p31 = scmp.ne.s32.totalorder %s23, %s25
      %p32 = scmp.eq.s32.totalorder %s20, 2
      %p33 = por %p31, %p32
      %p34 = scmp.ne.s32.totalorder %s25, %s26
      %p35 = scmp.eq.s32.totalorder %s20, 0
      %p36 = por %p34, %p35
      %p37 = scmp.ne.s32.totalorder %s25, %s26
      %p38 = scmp.eq.s32.totalorder %s21, 2
      %p39 = por %p37, %p38
      %p41 = scmp.ne.s32.totalorder %s26, %s40
      %p42 = scmp.eq.s32.totalorder %s21, 0
      %p43 = por %p41, %p42
      %s44 = ssub.s32 %s15, %s22
      %p45 = scmp.eq.s32.totalorder %s44, 0
      %s47 = sadd.s32 %s46, 1
      %s48 = scalar_select %p45, %s46, %s47
      %p51 = pneg %p45
      %p52 = scmp.eq.s32.totalorder %s15, 2
      %p53 = por %p51, %p52
      %p54 = scmp.ne.s32.totalorder %s46, %s49
      %p55 = scmp.eq.s32.totalorder %s15, 0
      %p56 = por %p54, %p55
      %p57 = scmp.ne.s32.totalorder %s46, %s49
      %p58 = scmp.eq.s32.totalorder %s20, 2
      %p59 = por %p57, %p58
      %p60 = scmp.ne.s32.totalorder %s49, %s50
      %p61 = scmp.eq.s32.totalorder %s20, 0
      %p62 = por %p60, %p61
      %p63 = scmp.ne.s32.totalorder %s49, %s50
      %p64 = scmp.eq.s32.totalorder %s21, 2
      %p65 = por %p63, %p64
      %p67 = scmp.ne.s32.totalorder %s50, %s66
      %p68 = scmp.eq.s32.totalorder %s21, 0
      %p69 = por %p67, %p68
      %s70 = ssub.s32 %s15, %s22
      %p71 = scmp.eq.s32.totalorder %s70, 0
      %s73 = sadd.s32 %s72, 1
      %s74 = scalar_select %p71, %s72, %s73
      %p77 = pneg %p71
      %p78 = scmp.eq.s32.totalorder %s15, 2
      %p79 = por %p77, %p78
      %p80 = scmp.ne.s32.totalorder %s72, %s75
      %p81 = scmp.eq.s32.totalorder %s15, 0
      %p82 = por %p80, %p81
      %p83 = scmp.ne.s32.totalorder %s72, %s75
      %p84 = scmp.eq.s32.totalorder %s20, 2
      %p85 = por %p83, %p84
      %p86 = scmp.ne.s32.totalorder %s75, %s76
      %p87 = scmp.eq.s32.totalorder %s20, 0
      %p88 = por %p86, %p87
      %p89 = scmp.ne.s32.totalorder %s75, %s76
      %p90 = scmp.eq.s32.totalorder %s21, 2
      %p91 = por %p89, %p90
      %p93 = scmp.ne.s32.totalorder %s76, %s92
      %p94 = scmp.eq.s32.totalorder %s21, 0
      %p95 = por %p93, %p94
      %p96 = scmp.le.s32.totalorder 1, %s15
      %p97 = scmp.lt.s32.totalorder %s15, 4
      %p98 = pnand %p96, %p97
      %p99 = pneg %p98
      // Predicated region
      $region9: #{tpu_custom_call.1} parent=5 // pred_check
        _
      $region10: #{tpu_custom_call.1} parent=5 // pred_check_branch
        %101 = sbr.rel (%p98) target = $region12
      $region11: #{tpu_custom_call.1} parent=5 // pred_region
        %s102 = ssub.s32 %s15, 1
        // Predicated region
        $region13: #{tpu_custom_call.1} parent=11 // pred_check
          %p103 = pneg %p36
        $region14: #{tpu_custom_call.1} parent=11 // pred_check_branch
          %105 = sbr.rel (%p103) target = $region16
        $region15: #{tpu_custom_call.1} parent=11 // pred_region
          %s107 = ssub.s32 128, 128
          %108 = vsyncadd [#allocation3], %s107
          %s110 = sshll.u32 [#allocation2], 4
          %s111 = int_to_ptr.vmem [resolvable:$true] %s110
          %113 = dma.hbm_to_vmem [thread:$0]  %s0, 128, %s111, [#allocation3]
        $region16: #{tpu_custom_call.1} parent=11 // pred_fallthru
          _
      $region12: #{tpu_custom_call.1} parent=5 // pred_fallthru
        _
      %p114 = scmp.lt.s32.totalorder %s15, 3
      // Predicated region
      $region17: #{tpu_custom_call.1} parent=5 // pred_check
        %p115 = pneg %p114
      $region18: #{tpu_custom_call.1} parent=5 // pred_check_branch
        %117 = sbr.rel (%p115) target = $region20
      $region19: #{tpu_custom_call.1} parent=5 // pred_region
        // Predicated region
        $region21: #{tpu_custom_call.1} parent=19 // pred_check
          %p118 = pneg %p56
        $region22: #{tpu_custom_call.1} parent=19 // pred_check_branch
          %120 = sbr.rel (%p118) target = $region24
        $region23: #{tpu_custom_call.1} parent=19 // pred_region
          %s121 = sand.u32 %s46, 1
          %s122 = scalar_lea.sflag [#allocation6], %s121
          %s123 = sand.u32 %s46, 1
          %s124 = smul.addr %s123, 384
          %s125 = scalar_lea.vmem [#allocation5], %s124
          %s126 = smul.u32 2, %s15
          %s127 = ssub.s32 5, %s126
          %p128 = scmp.lt.s32.totalorder %s127, 2
          %s129 = scalar_select %p128, %s127, 2
          %s130 = smul.u32 3072, %s129
          %s132 = ssub.s32 6144, %s130
          %133 = vsyncadd %s122, %s132
          %p134 = scmp.ne.s32.totalorder 0, %s130
          %s135 = smul.addr %s126, 128
          %s136 = scalar_lea.hbm %s1, %s135
          %s137 = smul.u32 %s129, 8
          %s138 = smul.u32 %s137, 24
          %s139 = sshll.u32 %s125, 4
          %s140 = int_to_ptr.vmem [resolvable:$true] %s139
          %s141 = sshll.u32 %s138, 4
          %145 = dma.hbm_to_vmem [thread:$0]  (%p134), %s136, %s141, %s140, %s122, 640, 256, %s137
        $region24: #{tpu_custom_call.1} parent=19 // pred_fallthru
          _
      $region20: #{tpu_custom_call.1} parent=5 // pred_fallthru
        _
      %p146 = scmp.le.s32.totalorder 1, %s15
      %p147 = scmp.lt.s32.totalorder %s15, 4
      %p148 = pnand %p146, %p147
      %p149 = pneg %p148
      // Predicated region
      $region25: #{tpu_custom_call.1} parent=5 // pred_check
        _
      $region26: #{tpu_custom_call.1} parent=5 // pred_check_branch
        %151 = sbr.rel (%p148) target = $region28
      $region27: #{tpu_custom_call.1} parent=5 // pred_region
        %s152 = ssub.s32 %s15, 1
        // Predicated region
        $region29: #{tpu_custom_call.1} parent=27 // pred_check
          %p153 = pneg %p36
        $region30: #{tpu_custom_call.1} parent=27 // pred_check_branch
          %155 = sbr.rel (%p153) target = $region32
        $region31: #{tpu_custom_call.1} parent=27 // pred_region
          %156 = dma.done [#allocation3], 128
        $region32: #{tpu_custom_call.1} parent=27 // pred_fallthru
          _
        %s157 = sand.u32 %s49, 1
        %s158 = scalar_lea.sflag [#allocation6], %s157
        %s159 = sand.u32 %s49, 1
        %s160 = smul.addr %s159, 384
        %s161 = scalar_lea.vmem [#allocation5], %s160
        // Predicated region
        $region33: #{tpu_custom_call.1} parent=27 // pred_check
          %p162 = pneg %p62
        $region34: #{tpu_custom_call.1} parent=27 // pred_check_branch
          %164 = sbr.rel (%p162) target = $region36
        $region35: #{tpu_custom_call.1} parent=27 // pred_region
          %165 = dma.done %s158, 6144
        $region36: #{tpu_custom_call.1} parent=27 // pred_fallthru
          _
        %p166 = pneg %p36
        %p167 = pneg %p33
        %s168 = sand.u32 %s49, 1
        %s169 = scalar_lea.sflag [#allocation6], %s168
        %s170 = sand.u32 %s49, 1
        %s171 = smul.addr %s170, 384
        %s172 = scalar_lea.vmem [#allocation5], %s171
        %p173 = pneg %p62
        %p174 = pneg %p59
        %p175 = pneg %p88
        %p176 = pneg %p85
        %s177 = sand.u32 %s75, 1
        %s178 = scalar_lea.sflag [#allocation4], %s177
        %s179 = sand.u32 %s75, 1
        %s180 = smul.addr %s179, 8
        %s181 = scalar_lea.vmem [#allocation7], %s180
        %s182 = smul.u32 2, %s20
        %s183 = ssub.s32 5, %s182
        %p184 = scmp.lt.s32.totalorder %s183, 2
        %s185 = scalar_select %p184, %s183, 2
        %s186 = smul.u32 3072, %s185
        %s187 = smul.u32 2, %s20
        %s188 = ssub.s32 5, %s187
        %p189 = scmp.lt.s32.totalorder %s188, 2
        %s190 = scalar_select %p189, %s188, 2
        %s191 = smul.u32 64, %s190
        %v192 = vld [vmem:[#allocation2] sm:$0xff]
        %v193 = vmul.f32 %v192, %v192
        %v195 = vcombine.high %v193, %v193
        %vm197 = vcmask 1043456
        %v198 = vsel %vm197, %v193, 0.0
        %vm199 = vcmask 519168
        %v200 = vsel %vm199, %v195, 0.0
        %v201 = vadd.f32 %v198, %v200
        %202 = vadd.xlane.f32.xlu0 %v201
        %v203 = vpop.xlane.xlu0 %202
        %v204 = vmax.f32 %v203, 1e-24
        %v205 = vrsqrt.pop %v204
        %v208 = vunpack.c.l.s4 839922192
        %v209 = vunpack.c.0.s8 %v208
        %v210 = vlaneseq
        %v211 = vshrl.u32 %v210, 7
        %v212 = vsub.s32 %v209, %v211
        %v213 = vrot.slane %v205, %v212
        %v215 = vmul.f32 %v192, %v213
        %v216 = vld [vmem:[%s161] sm:$0xff]
        %v217 = vld [vmem:[%s161 + $0x8] sm:$0xff]
        %v218 = vld [vmem:[%s161 + $0x10] sm:$0xff]
        %v219 = vld [vmem:[%s161 + $0x18] sm:$0xff]
        %v220 = vld [vmem:[%s161 + $0x20] sm:$0xff]
        %v221 = vld [vmem:[%s161 + $0x28] sm:$0xff]
        %v222 = vld [vmem:[%s161 + $0x30] sm:$0xff]
        %v223 = vld [vmem:[%s161 + $0x38] sm:$0xff]
        %v224 = vld [vmem:[%s161 + $0x40] sm:$0xff]
        %v225 = vld [vmem:[%s161 + $0x48] sm:$0xff]
        %v226 = vld [vmem:[%s161 + $0x50] sm:$0xff]
        %v227 = vld [vmem:[%s161 + $0x58] sm:$0xff]
        %v228 = vld [vmem:[%s161 + $0x60] sm:$0xff]
        %v229 = vld [vmem:[%s161 + $0x68] sm:$0xff]
        %v230 = vld [vmem:[%s161 + $0x70] sm:$0xff]
        %v231 = vld [vmem:[%s161 + $0x78] sm:$0xff]
        %v232 = vld [vmem:[%s161 + $0x80] sm:$0xff]
        %v233 = vld [vmem:[%s161 + $0x88] sm:$0xff]
        %v234 = vld [vmem:[%s161 + $0x90] sm:$0xff]
        %v235 = vld [vmem:[%s161 + $0x98] sm:$0xff]
        %v236 = vld [vmem:[%s161 + $0xa0] sm:$0xff]
        %v237 = vld [vmem:[%s161 + $0xa8] sm:$0xff]
        %v238 = vld [vmem:[%s161 + $0xb0] sm:$0xff]
        %v239 = vld [vmem:[%s161 + $0xb8] sm:$0xff]
        %v240 = vld [vmem:[%s161 + $0xc0] sm:$0xff]
        %v241 = vld [vmem:[%s161 + $0xc8] sm:$0xff]
        %v242 = vld [vmem:[%s161 + $0xd0] sm:$0xff]
        %v243 = vld [vmem:[%s161 + $0xd8] sm:$0xff]
        %v244 = vld [vmem:[%s161 + $0xe0] sm:$0xff]
        %v245 = vld [vmem:[%s161 + $0xe8] sm:$0xff]
        %v246 = vld [vmem:[%s161 + $0xf0] sm:$0xff]
        %v247 = vld [vmem:[%s161 + $0xf8] sm:$0xff]
        %v248 = vld [vmem:[%s161 + $0x100] sm:$0xff]
        %v249 = vld [vmem:[%s161 + $0x108] sm:$0xff]
        %v250 = vld [vmem:[%s161 + $0x110] sm:$0xff]
        %v251 = vld [vmem:[%s161 + $0x118] sm:$0xff]
        %v252 = vld [vmem:[%s161 + $0x120] sm:$0xff]
        %v253 = vld [vmem:[%s161 + $0x128] sm:$0xff]
        %v254 = vld [vmem:[%s161 + $0x130] sm:$0xff]
        %v255 = vld [vmem:[%s161 + $0x138] sm:$0xff]
        %v256 = vld [vmem:[%s161 + $0x140] sm:$0xff]
        %v257 = vld [vmem:[%s161 + $0x148] sm:$0xff]
        %v258 = vld [vmem:[%s161 + $0x150] sm:$0xff]
        %v259 = vld [vmem:[%s161 + $0x158] sm:$0xff]
        %v260 = vld [vmem:[%s161 + $0x160] sm:$0xff]
        %v261 = vld [vmem:[%s161 + $0x168] sm:$0xff]
        %v262 = vld [vmem:[%s161 + $0x170] sm:$0xff]
        %v263 = vld [vmem:[%s161 + $0x178] sm:$0xff]
        %v265 = vcombine.high %v215, %v215
        %vm266 = vcmask 523264
        %v267 = vsel %vm266, %v265, 0
        %269 = vmatprep.subr.mxu0 %v217
        %270 = vmatpush1.msra.mxu0 %v216
        %271 = vmatprep.subr.mxu0 %v219
        %272 = vmatpush1.msra.mxu0 %v218
        %273 = vmatprep.subr.mxu0 %v221
        %274 = vmatpush1.msra.mxu0 %v220
        %275 = vmatprep.subr.mxu0 %v223
        %276 = vmatpush1.msra.mxu0 %v222
        %277 = vmatprep.subr.mxu0 %v225
        %278 = vmatpush1.msra.mxu0 %v224
        %279 = vmatprep.subr.mxu0 %v227
        %280 = vmatpush1.msra.mxu0 %v226
        %281 = vmatprep.subr.mxu0 %v229
        %282 = vmatpush1.msra.mxu0 %v228
        %283 = vmatprep.subr.mxu0 %v231
        %284 = vmatpush1.msra.mxu0 %v230
        %285 = vmatprep.subr.mxu0 %v233
        %286 = vmatpush1.msra.mxu0 %v232
        %287 = vmatprep.subr.mxu0 %v235
        %288 = vmatpush1.msra.mxu0 %v234
        %289 = vmatprep.subr.mxu0 %v237
        %290 = vmatpush1.msra.mxu0 %v236
        %291 = vmatprep.subr.mxu0 %v239
        %292 = vmatpush1.msra.mxu0 %v238
        %293 = vmatprep.subr.mxu0 %v241
        %294 = vmatpush1.msra.mxu0 %v240
        %295 = vmatprep.subr.mxu0 %v243
        %296 = vmatpush1.msra.mxu0 %v242
        %297 = vmatprep.subr.mxu0 %v245
        %298 = vmatpush1.msra.mxu0 %v244
        %299 = vmatprep.subr.mxu0 %v247
        %300 = vmatpush1.msra.mxu0 %v246
        %301 = vmatprep.subr.mxu0 %v249
        %302 = vmatpush1.msra.mxu0 %v248
        %303 = vmatprep.subr.mxu0 %v251
        %304 = vmatpush1.msra.mxu0 %v250
        %305 = vmatprep.subr.mxu0 %v253
        %306 = vmatpush1.msra.mxu0 %v252
        %307 = vmatprep.subr.mxu0 %v255
        %308 = vmatpush1.msra.mxu0 %v254
        %309 = vmatprep.subr.mxu0 %v257
        %310 = vmatpush1.msra.mxu0 %v256
        %311 = vmatprep.subr.mxu0 %v259
        %312 = vmatpush1.msra.mxu0 %v258
        %313 = vmatprep.subr.mxu0 %v261
        %314 = vmatpush1.msra.mxu0 %v260
        %315 = vmatprep.subr.mxu0 %v263
        %316 = vmatpush1.msra.mxu0 %v262
        %317 = vmatprep.subr.mxu0 0.0
        %318 = vmatpush1.msra.mxu0 0.0
        %319 = vmatprep.subr.mxu0 0.0
        %320 = vmatpush1.msra.mxu0 0.0
        %321 = vmatprep.subr.mxu0 0.0
        %322 = vmatpush1.msra.mxu0 0.0
        %323 = vmatprep.subr.mxu0 0.0
        %324 = vmatpush1.msra.mxu0 0.0
        %325 = vmatprep.subr.mxu0 0.0
        %326 = vmatpush1.msra.mxu0 0.0
        %327 = vmatprep.subr.mxu0 0.0
        %328 = vmatpush1.msra.mxu0 0.0
        %329 = vmatprep.subr.mxu0 0.0
        %330 = vmatpush1.msra.mxu0 0.0
        %331 = vmatprep.subr.mxu0 0.0
        %332 = vmatpush1.msra.mxu0 0.0
        %333 = vmatprep.mubr.f32.mxu0 %v267
        %334 = vmatmul.mubr.f32.gmra.mrb[0].mxu0 %v215
        %v335 = vpop.f32.mrb[0].mxu0
        %v336 = vadd.f32 0.0, %v335
        %v337 = vpop.f32.mrb[0].mxu0
        %v338 = vadd.f32 0.0, %v337
        %339 = vdwg.mxu0
        %v342 = vcombine.low %v336, %v338
        %344 = vst [vmem:[%s181] sm:$0xff] %v342
        %s345 = sand.u32 %s75, 1
        %s346 = scalar_lea.sflag [#allocation4], %s345
        %s347 = sand.u32 %s75, 1
        %s348 = smul.addr %s347, 8
        %s349 = scalar_lea.vmem [#allocation7], %s348
        // Predicated region
        $region37: #{tpu_custom_call.1} parent=27 // pred_check
          %p350 = pneg %p85
        $region38: #{tpu_custom_call.1} parent=27 // pred_check_branch
          %352 = sbr.rel (%p350) target = $region40
        $region39: #{tpu_custom_call.1} parent=27 // pred_region
          %s353 = smul.u32 2, %s20
          %s354 = ssub.s32 5, %s353
          %p355 = scmp.lt.s32.totalorder %s354, 2
          %s356 = scalar_select %p355, %s354, 2
          %s357 = smul.u32 64, %s356
          %s359 = ssub.s32 128, %s357
          %360 = vsyncadd %s346, %s359
          %p361 = scmp.ne.s32.totalorder 0, %s357
          %s362 = smul.addr %s353, 64
          %s363 = scalar_lea.hbm %s2, %s362
          %s364 = smul.u32 %s356, 4
          %s365 = sshll.u32 %s364, 4
          %s366 = sshll.u32 %s349, 4
          %s367 = int_to_ptr.vmem [resolvable:$true] %s366
          %369 = dma.vmem_to_hbm [thread:$0]  (%p361), %s367, %s365, %s363, %s346
        $region40: #{tpu_custom_call.1} parent=27 // pred_fallthru
          _
      $region28: #{tpu_custom_call.1} parent=5 // pred_fallthru
        _
      %p370 = scmp.le.s32.totalorder 2, %s15
      // Predicated region
      $region41: #{tpu_custom_call.1} parent=5 // pred_check
        %p371 = pneg %p370
      $region42: #{tpu_custom_call.1} parent=5 // pred_check_branch
        %373 = sbr.rel (%p371) target = $region44
      $region43: #{tpu_custom_call.1} parent=5 // pred_region
        %s374 = ssub.s32 %s15, 2
        // Predicated region
        $region45: #{tpu_custom_call.1} parent=43 // pred_check
          %p375 = pneg %p91
        $region46: #{tpu_custom_call.1} parent=43 // pred_check_branch
          %377 = sbr.rel (%p375) target = $region48
        $region47: #{tpu_custom_call.1} parent=43 // pred_region
          %s378 = sand.u32 %s76, 1
          %s379 = scalar_lea.sflag [#allocation4], %s378
          %s380 = sand.u32 %s76, 1
          %s381 = smul.addr %s380, 8
          %s382 = scalar_lea.vmem [#allocation7], %s381
          %383 = dma.done %s379, 128
        $region48: #{tpu_custom_call.1} parent=43 // pred_fallthru
          _
      $region44: #{tpu_custom_call.1} parent=5 // pred_fallthru
        _
    $region6: #{tpu_custom_call.1} parent=1 // loop_footer
      %s19 = sadd.s32 1, %s15
    $region7: #{tpu_custom_call.1} parent=1 // loop_footer_branch
      %14 = sbr.rel target = $region3
    $region8: #{tpu_custom_call.1} parent=1 // loop_exit
      _
    %384 = vsyncpa [#allocation3], 1
    %s385 = scalar_lea.sflag [#allocation3], 1
    %386 = vsyncpa %s385, 1
    %387 = vsyncpa [#allocation6], 1
    %s388 = scalar_lea.sflag [#allocation6], 1
    %389 = vsyncpa %s388, 1
    %390 = vsyncpa [#allocation4], 1
    %s391 = scalar_lea.sflag [#allocation4], 1
    %392 = vsyncpa %s391, 1

</llo_original>
